<compile_context>
chip_gen: v5e
topology: v5e:2x2
jax: 0.10.0
libtpu: 0.0.40
codegen_flags: <defaults>
</compile_context>

<pallas_src>
import jax
import jax.numpy as jnp
from jax.experimental import pallas as pl
from jax.experimental.pallas import tpu as pltpu

INPUT_SIZE = 10
LAYER1 = 128
LAYER2 = 256
LAYER3 = 128
OUTPUT_SIZE = 3

IN_PAD = 128    # input features padded 10 -> 128 (lane-dense, aligned K)
OUT_PAD = 128   # output padded 3 -> 128 (lane-dense stores)

NEG_SLOPE = 0.01  # PyTorch F.leaky_relu default


def _leaky_relu(x):
    # max(x, a*x) == leaky_relu(x) for 0 < a < 1; saves a compare+select.
    return jnp.maximum(x, NEG_SLOPE * x)


def _ceil_to(n, m):
    return -(-n // m) * m


def dqn_kernel(x_ref, w1_ref, b1_ref, w2_ref, b2_ref, w3_ref, b3_ref,
               w4_ref, b4_ref, o_ref):
    # MXU operand dtype (f32 or bf16); accumulation / elementwise stay f32.
    p_dtype = w1_ref.dtype

    h = jnp.dot(x_ref[...], w1_ref[...], preferred_element_type=jnp.float32)
    h = _leaky_relu(h + b1_ref[...])

    h = jnp.dot(h.astype(p_dtype), w2_ref[...],
                preferred_element_type=jnp.float32)
    h = _leaky_relu(h + b2_ref[...])

    h = jnp.dot(h.astype(p_dtype), w3_ref[...],
                preferred_element_type=jnp.float32)
    h = _leaky_relu(h + b3_ref[...])

    out = jnp.dot(h.astype(p_dtype), w4_ref[...],
                  preferred_element_type=jnp.float32)
    o_ref[...] = (out + b4_ref[...]).astype(o_ref.dtype)


def prepare_params(params, param_dtype=jnp.float32):
    """Zero-pad ragged dims to lane/sublane-friendly shapes; cast weights."""
    w1 = jnp.zeros((IN_PAD, LAYER1), jnp.float32).at[:INPUT_SIZE, :].set(
        params["w1"])
    w4 = jnp.zeros((LAYER3, OUT_PAD), jnp.float32).at[:, :OUTPUT_SIZE].set(
        params["w4"])
    b4 = jnp.zeros((1, OUT_PAD), jnp.float32).at[:, :OUTPUT_SIZE].set(
        params["b4"])
    w2, w3 = params["w2"], params["w3"]

    weights = tuple(w.astype(param_dtype) for w in (w1, w2, w3, w4))
    biases = (params["b1"].astype(jnp.float32),
              params["b2"].astype(jnp.float32),
              params["b3"].astype(jnp.float32),
              b4)
    return weights, biases


def dqn_forward(x, params, *, block_b=256, param_dtype=jnp.float32):
    """x: [B, INPUT_SIZE] float32; params: dict of unpadded weights/biases."""
    B = x.shape[0]
    (w1, w2, w3, w4), (b1, b2, b3, b4) = prepare_params(params, param_dtype)

    # Batch tile: multiple of 8 (sublane), capped at block_b; pad B to a
    # whole number of tiles (padded rows are zeros and are sliced off).
    b8 = max(8, _ceil_to(B, 8))
    tb = min(block_b, b8)
    bp = _ceil_to(b8, tb)

    xp = jnp.zeros((bp, IN_PAD), param_dtype).at[:B, :INPUT_SIZE].set(
        x.astype(param_dtype))

    const = lambda a: pl.BlockSpec(a.shape, lambda i: (0,) * a.ndim)

    flops = 2 * bp * (IN_PAD * LAYER1 + LAYER1 * LAYER2 +
                      LAYER2 * LAYER3 + LAYER3 * OUT_PAD)
    bytes_accessed = (
        sum(a.size * a.dtype.itemsize
            for a in (w1, b1, w2, b2, w3, b3, w4, b4))
        + xp.size * xp.dtype.itemsize
        + bp * OUT_PAD * 4)

    out = pl.pallas_call(
        dqn_kernel,
        out_shape=jax.ShapeDtypeStruct((bp, OUT_PAD), jnp.float32),
        grid=(bp // tb,),
        in_specs=[
            pl.BlockSpec((tb, IN_PAD), lambda i: (i, 0)),   # x: tiled on batch
            const(w1), const(b1), const(w2), const(b2),     # weights resident
            const(w3), const(b3), const(w4), const(b4),
        ],
        out_specs=pl.BlockSpec((tb, OUT_PAD), lambda i: (i, 0)),
        compiler_params=pltpu.CompilerParams(
            dimension_semantics=("parallel",)),
        cost_estimate=pl.CostEstimate(
            flops=flops, transcendentals=0, bytes_accessed=bytes_accessed),
    )(xp, w1, b1, w2, b2, w3, b3, w4, b4)

    return out[:B, :OUTPUT_SIZE]


def init_params(key):
    """Deterministic init mimicking nn.Linear's uniform(-1/sqrt(fan_in), ...)."""
    dims = [(INPUT_SIZE, LAYER1), (LAYER1, LAYER2), (LAYER2, LAYER3),
            (LAYER3, OUTPUT_SIZE)]
    params = {}
    keys = jax.random.split(key, 2 * len(dims))
    for i, (fan_in, fan_out) in enumerate(dims):
        bound = 1.0 / jnp.sqrt(jnp.float32(fan_in))
        params[f"w{i + 1}"] = jax.random.uniform(
            keys[2 * i], (fan_in, fan_out), jnp.float32,
            minval=-bound, maxval=bound)
        params[f"b{i + 1}"] = jax.random.uniform(
            keys[2 * i + 1], (1, fan_out), jnp.float32,
            minval=-bound, maxval=bound)
    return params


def dqn_reference(x, params):
    h = x
    for i in range(1, 4):
        h = h @ params[f"w{i}"] + params[f"b{i}"]
        h = jnp.where(h > 0, h, NEG_SLOPE * h)
    return h @ params["w4"] + params["b4"]


if __name__ == "__main__":
    key = jax.random.PRNGKey(0)
    pkey, xkey = jax.random.split(key)
    params = init_params(pkey)

    # Small demo batch (note: at B=8 the kernel is latency-bound; the batch
    # grid / pipelining pays off once callers batch to B >= 128).
    B = 8
    x = jax.random.normal(xkey, (B, INPUT_SIZE), dtype=jnp.float32)

    out = jax.block_until_ready(dqn_forward(x, params))
    ref = dqn_reference(x, params)
    assert out.shape == (B, OUTPUT_SIZE), out.shape
    assert jnp.allclose(out, ref, atol=1e-4, rtol=1e-4), (
        float(jnp.max(jnp.abs(out - ref))))

    # Exercise a multi-step grid + ragged (non-multiple-of-tile) batch.
    B2 = 33
    x2 = jax.random.normal(jax.random.PRNGKey(1), (B2, INPUT_SIZE),
                           dtype=jnp.float32)
    out2 = jax.block_until_ready(dqn_forward(x2, params, block_b=16))
    ref2 = dqn_reference(x2, params)
    assert out2.shape == (B2, OUTPUT_SIZE), out2.shape
    assert jnp.allclose(out2, ref2, atol=1e-4, rtol=1e-4), (
        float(jnp.max(jnp.abs(out2 - ref2))))

    # bf16 MXU operands (v6e/v7x fast path), f32 accumulate/elementwise.
    out_bf16 = jax.block_until_ready(
        dqn_forward(x, params, param_dtype=jnp.bfloat16))
    assert out_bf16.shape == (B, OUTPUT_SIZE), out_bf16.shape
    assert jnp.allclose(out_bf16, ref, atol=1e-1, rtol=1e-1), (
        float(jnp.max(jnp.abs(out_bf16 - ref))))

    print("KERNEL_OK")
</pallas_src>

<mosaic_0001>
module attributes {stable_mosaic.version = 11 : i64} {
  func.func @dqn_kernel(%arg0: i32, %arg1: memref<8x128xf32, #tpu.memory_space<vmem>>, %arg2: memref<128x128xf32, #tpu.memory_space<vmem>>, %arg3: memref<1x128xf32, #tpu.memory_space<vmem>>, %arg4: memref<128x256xf32, #tpu.memory_space<vmem>>, %arg5: memref<1x256xf32, #tpu.memory_space<vmem>>, %arg6: memref<256x128xf32, #tpu.memory_space<vmem>>, %arg7: memref<1x128xf32, #tpu.memory_space<vmem>>, %arg8: memref<128x128xf32, #tpu.memory_space<vmem>>, %arg9: memref<1x128xf32, #tpu.memory_space<vmem>>, %arg10: memref<8x128xf32, #tpu.memory_space<vmem>>) attributes {dimension_semantics = [#tpu.dimension_semantics<parallel>], iteration_bounds = array<i64: 1>, scalar_prefetch = 0 : i64, scratch_operands = 0 : i64, tpu.core_type = #tpu.core_type<tc>, window_params = [{transform_indices = @transform_0, window_bounds = array<i64: 8, 128>}, {pipeline_mode = #tpu.pipeline_mode<synchronous>, transform_indices = @transform_1, window_bounds = array<i64: 128, 128>}, {pipeline_mode = #tpu.pipeline_mode<synchronous>, transform_indices = @transform_2, window_bounds = array<i64: 1, 128>}, {pipeline_mode = #tpu.pipeline_mode<synchronous>, transform_indices = @transform_3, window_bounds = array<i64: 128, 256>}, {pipeline_mode = #tpu.pipeline_mode<synchronous>, transform_indices = @transform_4, window_bounds = array<i64: 1, 256>}, {pipeline_mode = #tpu.pipeline_mode<synchronous>, transform_indices = @transform_5, window_bounds = array<i64: 256, 128>}, {pipeline_mode = #tpu.pipeline_mode<synchronous>, transform_indices = @transform_6, window_bounds = array<i64: 1, 128>}, {pipeline_mode = #tpu.pipeline_mode<synchronous>, transform_indices = @transform_7, window_bounds = array<i64: 128, 128>}, {pipeline_mode = #tpu.pipeline_mode<synchronous>, transform_indices = @transform_8, window_bounds = array<i64: 1, 128>}, {transform_indices = @transform_9, window_bounds = array<i64: 8, 128>}]} {
    %c0 = arith.constant 0 : index
    %c0_0 = arith.constant 0 : index
    %0 = vector.load %arg1[%c0, %c0_0] : memref<8x128xf32, #tpu.memory_space<vmem>>, vector<8x128xf32>
    %c0_1 = arith.constant 0 : index
    %c0_2 = arith.constant 0 : index
    %1 = vector.load %arg2[%c0_1, %c0_2] : memref<128x128xf32, #tpu.memory_space<vmem>>, vector<128x128xf32>
    %cst = arith.constant dense<0.000000e+00> : vector<8x128xf32>
    %2 = tpu.matmul %0, %1, %cst {dimension_numbers = #tpu.dot_dimension_numbers<[1], [0], [0], [1], [0, 0, 1, 1], [], []>} : vector<8x128xf32>, vector<128x128xf32>, vector<8x128xf32> -> vector<8x128xf32>
    %c0_3 = arith.constant 0 : index
    %c0_4 = arith.constant 0 : index
    %3 = vector.load %arg3[%c0_3, %c0_4] : memref<1x128xf32, #tpu.memory_space<vmem>>, vector<1x128xf32>
    %4 = vector.broadcast %3 : vector<1x128xf32> to vector<8x128xf32>
    %5 = arith.addf %2, %4 : vector<8x128xf32>
    %cst_5 = arith.constant 0.00999999977 : f32
    %6 = vector.broadcast %cst_5 : f32 to vector<8x128xf32>
    %7 = arith.mulf %6, %5 : vector<8x128xf32>
    %8 = arith.maximumf %5, %7 : vector<8x128xf32>
    %c0_6 = arith.constant 0 : index
    %c0_7 = arith.constant 0 : index
    %9 = vector.load %arg4[%c0_6, %c0_7] : memref<128x256xf32, #tpu.memory_space<vmem>>, vector<128x256xf32>
    %cst_8 = arith.constant dense<0.000000e+00> : vector<8x256xf32>
    %10 = tpu.matmul %8, %9, %cst_8 {dimension_numbers = #tpu.dot_dimension_numbers<[1], [0], [0], [1], [0, 0, 1, 1], [], []>} : vector<8x128xf32>, vector<128x256xf32>, vector<8x256xf32> -> vector<8x256xf32>
    %c0_9 = arith.constant 0 : index
    %c0_10 = arith.constant 0 : index
    %11 = vector.load %arg5[%c0_9, %c0_10] : memref<1x256xf32, #tpu.memory_space<vmem>>, vector<1x256xf32>
    %12 = vector.broadcast %11 : vector<1x256xf32> to vector<8x256xf32>
    %13 = arith.addf %10, %12 : vector<8x256xf32>
    %cst_11 = arith.constant 0.00999999977 : f32
    %14 = vector.broadcast %cst_11 : f32 to vector<8x256xf32>
    %15 = arith.mulf %14, %13 : vector<8x256xf32>
    %16 = arith.maximumf %13, %15 : vector<8x256xf32>
    %c0_12 = arith.constant 0 : index
    %c0_13 = arith.constant 0 : index
    %17 = vector.load %arg6[%c0_12, %c0_13] : memref<256x128xf32, #tpu.memory_space<vmem>>, vector<256x128xf32>
    %cst_14 = arith.constant dense<0.000000e+00> : vector<8x128xf32>
    %18 = tpu.matmul %16, %17, %cst_14 {dimension_numbers = #tpu.dot_dimension_numbers<[1], [0], [0], [1], [0, 0, 1, 1], [], []>} : vector<8x256xf32>, vector<256x128xf32>, vector<8x128xf32> -> vector<8x128xf32>
    %c0_15 = arith.constant 0 : index
    %c0_16 = arith.constant 0 : index
    %19 = vector.load %arg7[%c0_15, %c0_16] : memref<1x128xf32, #tpu.memory_space<vmem>>, vector<1x128xf32>
    %20 = vector.broadcast %19 : vector<1x128xf32> to vector<8x128xf32>
    %21 = arith.addf %18, %20 : vector<8x128xf32>
    %cst_17 = arith.constant 0.00999999977 : f32
    %22 = vector.broadcast %cst_17 : f32 to vector<8x128xf32>
    %23 = arith.mulf %22, %21 : vector<8x128xf32>
    %24 = arith.maximumf %21, %23 : vector<8x128xf32>
    %c0_18 = arith.constant 0 : index
    %c0_19 = arith.constant 0 : index
    %25 = vector.load %arg8[%c0_18, %c0_19] : memref<128x128xf32, #tpu.memory_space<vmem>>, vector<128x128xf32>
    %cst_20 = arith.constant dense<0.000000e+00> : vector<8x128xf32>
    %26 = tpu.matmul %24, %25, %cst_20 {dimension_numbers = #tpu.dot_dimension_numbers<[1], [0], [0], [1], [0, 0, 1, 1], [], []>} : vector<8x128xf32>, vector<128x128xf32>, vector<8x128xf32> -> vector<8x128xf32>
    %c0_21 = arith.constant 0 : index
    %c0_22 = arith.constant 0 : index
    %27 = vector.load %arg9[%c0_21, %c0_22] : memref<1x128xf32, #tpu.memory_space<vmem>>, vector<1x128xf32>
    %28 = vector.broadcast %27 : vector<1x128xf32> to vector<8x128xf32>
    %29 = arith.addf %26, %28 : vector<8x128xf32>
    %c0_23 = arith.constant 0 : index
    %c0_24 = arith.constant 0 : index
    %30 = vector.load %arg10[%c0_23, %c0_24] : memref<8x128xf32, #tpu.memory_space<vmem>>, vector<8x128xf32>
    tpu.vector_store %arg10[%c0_23, %c0_24], %29 {strides = array<i32>} : memref<8x128xf32, #tpu.memory_space<vmem>>, vector<8x128xf32>,
    return
  }
  func.func @transform_0(%arg0: i32) -> (i32, i32) {
    %c0_i32 = arith.constant 0 : i32
    %c0_i32_0 = arith.constant 0 : i32
    return %arg0, %c0_i32 : i32, i32
  }
  func.func @transform_1(%arg0: i32) -> (i32, i32) {
    %c0_i32 = arith.constant 0 : i32
    %c0_i32_0 = arith.constant 0 : i32
    %c0_i32_1 = arith.constant 0 : i32
    return %c0_i32, %c0_i32_0 : i32, i32
  }
  func.func @transform_2(%arg0: i32) -> (i32, i32) {
    %c0_i32 = arith.constant 0 : i32
    %c0_i32_0 = arith.constant 0 : i32
    %c0_i32_1 = arith.constant 0 : i32
    return %c0_i32, %c0_i32_0 : i32, i32
  }
  func.func @transform_3(%arg0: i32) -> (i32, i32) {
    %c0_i32 = arith.constant 0 : i32
    %c0_i32_0 = arith.constant 0 : i32
    %c0_i32_1 = arith.constant 0 : i32
    return %c0_i32, %c0_i32_0 : i32, i32
  }
  func.func @transform_4(%arg0: i32) -> (i32, i32) {
    %c0_i32 = arith.constant 0 : i32
    %c0_i32_0 = arith.constant 0 : i32
    %c0_i32_1 = arith.constant 0 : i32
    return %c0_i32, %c0_i32_0 : i32, i32
  }
  func.func @transform_5(%arg0: i32) -> (i32, i32) {
    %c0_i32 = arith.constant 0 : i32
    %c0_i32_0 = arith.constant 0 : i32
    %c0_i32_1 = arith.constant 0 : i32
    return %c0_i32, %c0_i32_0 : i32, i32
  }
  func.func @transform_6(%arg0: i32) -> (i32, i32) {
    %c0_i32 = arith.constant 0 : i32
    %c0_i32_0 = arith.constant 0 : i32
    %c0_i32_1 = arith.constant 0 : i32
    return %c0_i32, %c0_i32_0 : i32, i32
  }
  func.func @transform_7(%arg0: i32) -> (i32, i32) {
    %c0_i32 = arith.constant 0 : i32
    %c0_i32_0 = arith.constant 0 : i32
    %c0_i32_1 = arith.constant 0 : i32
    return %c0_i32, %c0_i32_0 : i32, i32
  }
  func.func @transform_8(%arg0: i32) -> (i32, i32) {
    %c0_i32 = arith.constant 0 : i32
    %c0_i32_0 = arith.constant 0 : i32
    %c0_i32_1 = arith.constant 0 : i32
    return %c0_i32, %c0_i32_0 : i32, i32
  }
  func.func @transform_9(%arg0: i32) -> (i32, i32) {
    %c0_i32 = arith.constant 0 : i32
    %c0_i32_0 = arith.constant 0 : i32
    return %arg0, %c0_i32 : i32, i32
  }
}

</mosaic_0001>

<llo_original>
// kernel: tpu_custom_call.1
$region0: #{tpu_custom_call.1}
  #allocation0 [shape = 'u32[]', space=smem, size = 0x4, offset = 0x4, fixed_abs, tag = 'smem constant byte address 0x4 - core index']
  #allocation1 [shape = 'u32[72,128]{1,0:T(1,128)}', space=vmem, size = 0x9000, scoped, tag = 'internal scratch']
  %s0 = inlined_call_operand.hbm [shape: f32[8,128], index: 0, kind: input, shape index: {}]
  %s1 = inlined_call_operand.hbm [shape: f32[128,128], index: 1, kind: input, shape index: {}]
  %s2 = inlined_call_operand.vmem [shape: f32[1,128], index: 2, kind: input, shape index: {}]
  %s3 = inlined_call_operand.hbm [shape: f32[128,256], index: 3, kind: input, shape index: {}]
  %s4 = inlined_call_operand.vmem [shape: f32[1,256], index: 4, kind: input, shape index: {}]
  %s5 = inlined_call_operand.hbm [shape: f32[256,128], index: 5, kind: input, shape index: {}]
  %s6 = inlined_call_operand.vmem [shape: f32[1,128], index: 6, kind: input, shape index: {}]
  %s7 = inlined_call_operand.hbm [shape: f32[128,128], index: 7, kind: input, shape index: {}]
  %s8 = inlined_call_operand.vmem [shape: f32[1,128], index: 8, kind: input, shape index: {}]
  %s9 = inlined_call_operand.hbm [shape: f32[8,128], index: 9, kind: output, shape index: {}]
  %s10 = sld [smem:[#allocation0]]
  $region66: #{tpu_custom_call.1} parent=0
    _
  %s12 = ssub.s32 1, %s10
  %s13 = scalar_select 0, %s12, %s10
  $region1: #{tpu_custom_call.1} parent=0
    #allocation2 [shape = 'u8[4096]{0}', space=vmem, size = 0x1000, scoped, tag = 'input window, operand 0, single buffered']
    #allocation3 [shape = 's32[1]{0}', space=sflag, size = 0x4, scoped, tag = 'scoped memory for tpu_custom_call.1']
    #allocation4 [shape = 's32[1]{0}', space=sflag, size = 0x4, scoped, tag = 'scoped memory for tpu_custom_call.1']
    #allocation5 [shape = 'u8[65536]{0}', space=vmem, size = 0x10000, scoped, tag = 'input window, operand 1, single buffered']
    #allocation6 [shape = 's32[1]{0}', space=sflag, size = 0x4, scoped, tag = 'scoped memory for tpu_custom_call.1']
    #allocation7 [shape = 'u8[131072]{0}', space=vmem, size = 0x20000, scoped, tag = 'input window, operand 3, single buffered']
    #allocation8 [shape = 'u8[131072]{0}', space=vmem, size = 0x20000, scoped, tag = 'input window, operand 5, single buffered']
    #allocation9 [shape = 's32[1]{0}', space=sflag, size = 0x4, scoped, tag = 'scoped memory for tpu_custom_call.1']
    #allocation10 [shape = 'u8[65536]{0}', space=vmem, size = 0x10000, scoped, tag = 'input window, operand 7, single buffered']
    #allocation11 [shape = 'u8[4096]{0}', space=vmem, size = 0x1000, scoped, tag = 'output window, operand 0, single buffered']
    %14 = vsyncpa [#allocation3], 0
    %15 = vsyncpa [#allocation6], 0
    %16 = vsyncpa [#allocation9], 0
    %17 = vsyncpa [#allocation4], 0
    // Predicated region
    $region2: #{tpu_custom_call.1} parent=1 // pred_check
      _
    $region3: #{tpu_custom_call.1} parent=1 // pred_check_branch
      %19 = sbr.rel (0) target = $region5
    $region4: #{tpu_custom_call.1} parent=1 // pred_region
      %21 = vsyncadd [#allocation3], 0
      %s23 = sshll.u32 %s0, 4
      %s24 = int_to_ptr.hbm [resolvable:$true] %s23
      %s25 = sshll.u32 [#allocation2], 4
      %s26 = int_to_ptr.vmem [resolvable:$true] %s25
      %28 = dma.hbm_to_vmem [thread:$0]  %s24, 128, %s26, [#allocation3]
    $region5: #{tpu_custom_call.1} parent=1 // pred_fallthru
      _
    // Predicated region
    $region6: #{tpu_custom_call.1} parent=1 // pred_check
      _
    $region7: #{tpu_custom_call.1} parent=1 // pred_check_branch
      %30 = sbr.rel (0) target = $region9
    $region8: #{tpu_custom_call.1} parent=1 // pred_region
      %32 = vsyncadd [#allocation6], 0
      %s33 = sshll.u32 %s1, 4
      %s34 = int_to_ptr.hbm [resolvable:$true] %s33
      %s35 = sshll.u32 [#allocation5], 4
      %s36 = int_to_ptr.vmem [resolvable:$true] %s35
      %41 = dma.hbm_to_vmem [thread:$0]  %s34, 2048, %s36, [#allocation6], 128, 128, 8
    $region9: #{tpu_custom_call.1} parent=1 // pred_fallthru
      _
    // Predicated region
    $region10: #{tpu_custom_call.1} parent=1 // pred_check
      _
    $region11: #{tpu_custom_call.1} parent=1 // pred_check_branch
      %43 = sbr.rel (0) target = $region13
    $region12: #{tpu_custom_call.1} parent=1 // pred_region
      _
    $region13: #{tpu_custom_call.1} parent=1 // pred_fallthru
      _
    // Predicated region
    $region14: #{tpu_custom_call.1} parent=1 // pred_check
      _
    $region15: #{tpu_custom_call.1} parent=1 // pred_check_branch
      %45 = sbr.rel (0) target = $region17
    $region16: #{tpu_custom_call.1} parent=1 // pred_region
      %47 = vsyncadd [#allocation6], 0
      %s48 = sshll.u32 %s3, 4
      %s49 = int_to_ptr.hbm [resolvable:$true] %s48
      %s50 = sshll.u32 [#allocation7], 4
      %s51 = int_to_ptr.vmem [resolvable:$true] %s50
      %56 = dma.hbm_to_vmem [thread:$0]  %s49, 4096, %s51, [#allocation6], 256, 256, 16
    $region17: #{tpu_custom_call.1} parent=1 // pred_fallthru
      _
    // Predicated region
    $region18: #{tpu_custom_call.1} parent=1 // pred_check
      _
    $region19: #{tpu_custom_call.1} parent=1 // pred_check_branch
      %58 = sbr.rel (0) target = $region21
    $region20: #{tpu_custom_call.1} parent=1 // pred_region
      _
    $region21: #{tpu_custom_call.1} parent=1 // pred_fallthru
      _
    // Predicated region
    $region22: #{tpu_custom_call.1} parent=1 // pred_check
      _
    $region23: #{tpu_custom_call.1} parent=1 // pred_check_branch
      %60 = sbr.rel (0) target = $region25
    $region24: #{tpu_custom_call.1} parent=1 // pred_region
      %62 = vsyncadd [#allocation9], 0
      %s63 = sshll.u32 %s5, 4
      %s64 = int_to_ptr.hbm [resolvable:$true] %s63
      %s65 = sshll.u32 [#allocation8], 4
      %s66 = int_to_ptr.vmem [resolvable:$true] %s65
      %71 = dma.hbm_to_vmem [thread:$0]  %s64, 4096, %s66, [#allocation9], 128, 128, 8
    $region25: #{tpu_custom_call.1} parent=1 // pred_fallthru
      _
    // Predicated region
    $region26: #{tpu_custom_call.1} parent=1 // pred_check
      _
    $region27: #{tpu_custom_call.1} parent=1 // pred_check_branch
      %73 = sbr.rel (0) target = $region29
    $region28: #{tpu_custom_call.1} parent=1 // pred_region
      _
    $region29: #{tpu_custom_call.1} parent=1 // pred_fallthru
      _
    // Predicated region
    $region30: #{tpu_custom_call.1} parent=1 // pred_check
      _
    $region31: #{tpu_custom_call.1} parent=1 // pred_check_branch
      %75 = sbr.rel (0) target = $region33
    $region32: #{tpu_custom_call.1} parent=1 // pred_region
      %77 = vsyncadd [#allocation9], 0
      %s78 = sshll.u32 %s7, 4
      %s79 = int_to_ptr.hbm [resolvable:$true] %s78
      %s80 = sshll.u32 [#allocation10], 4
      %s81 = int_to_ptr.vmem [resolvable:$true] %s80
      %86 = dma.hbm_to_vmem [thread:$0]  %s79, 2048, %s81, [#allocation9], 128, 128, 8
    $region33: #{tpu_custom_call.1} parent=1 // pred_fallthru
      _
    // Predicated region
    $region34: #{tpu_custom_call.1} parent=1 // pred_check
      _
    $region35: #{tpu_custom_call.1} parent=1 // pred_check_branch
      %88 = sbr.rel (0) target = $region37
    $region36: #{tpu_custom_call.1} parent=1 // pred_region
      _
    $region37: #{tpu_custom_call.1} parent=1 // pred_fallthru
      _
    // Predicated region
    $region38: #{tpu_custom_call.1} parent=1 // pred_check
      _
    $region39: #{tpu_custom_call.1} parent=1 // pred_check_branch
      %90 = sbr.rel (0) target = $region41
    $region40: #{tpu_custom_call.1} parent=1 // pred_region
      %92 = dma.done [#allocation3], 128
    $region41: #{tpu_custom_call.1} parent=1 // pred_fallthru
      _
    // Predicated region
    $region42: #{tpu_custom_call.1} parent=1 // pred_check
      _
    $region43: #{tpu_custom_call.1} parent=1 // pred_check_branch
      %94 = sbr.rel (0) target = $region45
    $region44: #{tpu_custom_call.1} parent=1 // pred_region
      %96 = dma.done [#allocation6], 2048
    $region45: #{tpu_custom_call.1} parent=1 // pred_fallthru
      _
    // Predicated region
    $region46: #{tpu_custom_call.1} parent=1 // pred_check
      _
    $region47: #{tpu_custom_call.1} parent=1 // pred_check_branch
      %98 = sbr.rel (0) target = $region49
    $region48: #{tpu_custom_call.1} parent=1 // pred_region
      %100 = dma.done [#allocation6], 4096
    $region49: #{tpu_custom_call.1} parent=1 // pred_fallthru
      _
    // Predicated region
    $region50: #{tpu_custom_call.1} parent=1 // pred_check
      _
    $region51: #{tpu_custom_call.1} parent=1 // pred_check_branch
      %102 = sbr.rel (0) target = $region53
    $region52: #{tpu_custom_call.1} parent=1 // pred_region
      %104 = dma.done [#allocation9], 4096
    $region53: #{tpu_custom_call.1} parent=1 // pred_fallthru
      _
    // Predicated region
    $region54: #{tpu_custom_call.1} parent=1 // pred_check
      _
    $region55: #{tpu_custom_call.1} parent=1 // pred_check_branch
      %106 = sbr.rel (0) target = $region57
    $region56: #{tpu_custom_call.1} parent=1 // pred_region
      %108 = dma.done [#allocation9], 2048
    $region57: #{tpu_custom_call.1} parent=1 // pred_fallthru
      _
    %v109 = vld [vmem:[#allocation2] sm:$0xff]
    %v110 = vld [vmem:[#allocation5] sm:$0xff]
    %v111 = vld [vmem:[#allocation5 + $0x8] sm:$0xff]
    %v112 = vld [vmem:[#allocation5 + $0x10] sm:$0xff]
    %v113 = vld [vmem:[#allocation5 + $0x18] sm:$0xff]
    %v114 = vld [vmem:[#allocation5 + $0x20] sm:$0xff]
    %v115 = vld [vmem:[#allocation5 + $0x28] sm:$0xff]
    %v116 = vld [vmem:[#allocation5 + $0x30] sm:$0xff]
    %v117 = vld [vmem:[#allocation5 + $0x38] sm:$0xff]
    %v118 = vld [vmem:[#allocation5 + $0x40] sm:$0xff]
    %v119 = vld [vmem:[#allocation5 + $0x48] sm:$0xff]
    %v120 = vld [vmem:[#allocation5 + $0x50] sm:$0xff]
    %v121 = vld [vmem:[#allocation5 + $0x58] sm:$0xff]
    %v122 = vld [vmem:[#allocation5 + $0x60] sm:$0xff]
    %v123 = vld [vmem:[#allocation5 + $0x68] sm:$0xff]
    %v124 = vld [vmem:[#allocation5 + $0x70] sm:$0xff]
    %v125 = vld [vmem:[#allocation5 + $0x78] sm:$0xff]
    %v126 = vld [vmem:[%s2] sm:$0x1]
    %v128 = vperm.slane %v126, 0
    %130 = vmatpush.msra.mxu0 %v125
    %131 = vmatpush.msra.mxu0 %v124
    %132 = vmatpush.msra.mxu0 %v123
    %133 = vmatpush.msra.mxu0 %v122
    %134 = vmatpush.msra.mxu0 %v121
    %135 = vmatpush.msra.mxu0 %v120
    %136 = vmatpush.msra.mxu0 %v119
    %137 = vmatpush.msra.mxu0 %v118
    %138 = vmatpush.msra.mxu0 %v117
    %139 = vmatpush.msra.mxu0 %v116
    %140 = vmatpush.msra.mxu0 %v115
    %141 = vmatpush.msra.mxu0 %v114
    %142 = vmatpush.msra.mxu0 %v113
    %143 = vmatpush.msra.mxu0 %v112
    %144 = vmatpush.msra.mxu0 %v111
    %145 = vmatpush.msra.mxu0 %v110
    %146 = vmatmul.f32.gmra.mxu0 %v109
    %v147 = vpop.f32.mrf.mxu0
    %v148 = vadd.f32 %v128, %v147
    %149 = vdwg.mxu0
    %v150 = vmul.f32 %v148, 0.01
    %v151 = vmax.f32 %v148, %v150
    %v152 = vld [vmem:[#allocation7] sm:$0xff]
    %v153 = vld [vmem:[#allocation7 + $0x8] sm:$0xff]
    %v154 = vld [vmem:[#allocation7 + $0x10] sm:$0xff]
    %v155 = vld [vmem:[#allocation7 + $0x18] sm:$0xff]
    %v156 = vld [vmem:[#allocation7 + $0x20] sm:$0xff]
    %v157 = vld [vmem:[#allocation7 + $0x28] sm:$0xff]
    %v158 = vld [vmem:[#allocation7 + $0x30] sm:$0xff]
    %v159 = vld [vmem:[#allocation7 + $0x38] sm:$0xff]
    %v160 = vld [vmem:[#allocation7 + $0x40] sm:$0xff]
    %v161 = vld [vmem:[#allocation7 + $0x48] sm:$0xff]
    %v162 = vld [vmem:[#allocation7 + $0x50] sm:$0xff]
    %v163 = vld [vmem:[#allocation7 + $0x58] sm:$0xff]
    %v164 = vld [vmem:[#allocation7 + $0x60] sm:$0xff]
    %v165 = vld [vmem:[#allocation7 + $0x68] sm:$0xff]
    %v166 = vld [vmem:[#allocation7 + $0x70] sm:$0xff]
    %v167 = vld [vmem:[#allocation7 + $0x78] sm:$0xff]
    %v168 = vld [vmem:[#allocation7 + $0x80] sm:$0xff]
    %v169 = vld [vmem:[#allocation7 + $0x88] sm:$0xff]
    %v170 = vld [vmem:[#allocation7 + $0x90] sm:$0xff]
    %v171 = vld [vmem:[#allocation7 + $0x98] sm:$0xff]
    %v172 = vld [vmem:[#allocation7 + $0xa0] sm:$0xff]
    %v173 = vld [vmem:[#allocation7 + $0xa8] sm:$0xff]
    %v174 = vld [vmem:[#allocation7 + $0xb0] sm:$0xff]
    %v175 = vld [vmem:[#allocation7 + $0xb8] sm:$0xff]
    %v176 = vld [vmem:[#allocation7 + $0xc0] sm:$0xff]
    %v177 = vld [vmem:[#allocation7 + $0xc8] sm:$0xff]
    %v178 = vld [vmem:[#allocation7 + $0xd0] sm:$0xff]
    %v179 = vld [vmem:[#allocation7 + $0xd8] sm:$0xff]
    %v180 = vld [vmem:[#allocation7 + $0xe0] sm:$0xff]
    %v181 = vld [vmem:[#allocation7 + $0xe8] sm:$0xff]
    %v182 = vld [vmem:[#allocation7 + $0xf0] sm:$0xff]
    %v183 = vld [vmem:[#allocation7 + $0xf8] sm:$0xff]
    %v184 = vld [vmem:[%s4] sm:$0x3]
    %v186 = vperm.slane %v184, 0
    %v187 = vperm.slane %v184, 1
    %190 = vmatpush.msra.mxu0 %v182
    %191 = vmatpush.msra.mxu0 %v180
    %192 = vmatpush.msra.mxu0 %v178
    %193 = vmatpush.msra.mxu0 %v176
    %194 = vmatpush.msra.mxu0 %v174
    %195 = vmatpush.msra.mxu0 %v172
    %196 = vmatpush.msra.mxu0 %v170
    %197 = vmatpush.msra.mxu0 %v168
    %198 = vmatpush.msra.mxu0 %v166
    %199 = vmatpush.msra.mxu0 %v164
    %200 = vmatpush.msra.mxu0 %v162
    %201 = vmatpush.msra.mxu0 %v160
    %202 = vmatpush.msra.mxu0 %v158
    %203 = vmatpush.msra.mxu0 %v156
    %204 = vmatpush.msra.mxu0 %v154
    %205 = vmatpush.msra.mxu0 %v152
    %206 = vmatmul.f32.gmra.mxu0 %v151
    %v207 = vpop.f32.mrf.mxu0
    %v208 = vadd.f32 %v186, %v207
    %209 = vdwg.mxu0
    %210 = vmatpush.msra.mxu0 %v183
    %211 = vmatpush.msra.mxu0 %v181
    %212 = vmatpush.msra.mxu0 %v179
    %213 = vmatpush.msra.mxu0 %v177
    %214 = vmatpush.msra.mxu0 %v175
    %215 = vmatpush.msra.mxu0 %v173
    %216 = vmatpush.msra.mxu0 %v171
    %217 = vmatpush.msra.mxu0 %v169
    %218 = vmatpush.msra.mxu0 %v167
    %219 = vmatpush.msra.mxu0 %v165
    %220 = vmatpush.msra.mxu0 %v163
    %221 = vmatpush.msra.mxu0 %v161
    %222 = vmatpush.msra.mxu0 %v159
    %223 = vmatpush.msra.mxu0 %v157
    %224 = vmatpush.msra.mxu0 %v155
    %225 = vmatpush.msra.mxu0 %v153
    %226 = vmatmul.f32.gmra.mxu0 %v151
    %v227 = vpop.f32.mrf.mxu0
    %v228 = vadd.f32 %v187, %v227
    %229 = vdwg.mxu0
    %v230 = vmul.f32 %v208, 0.01
    %v231 = vmul.f32 %v228, 0.01
    %v232 = vmax.f32 %v208, %v230
    %v233 = vmax.f32 %v228, %v231
    %v234 = vld [vmem:[#allocation8] sm:$0xff]
    %v235 = vld [vmem:[#allocation8 + $0x8] sm:$0xff]
    %v236 = vld [vmem:[#allocation8 + $0x10] sm:$0xff]
    %v237 = vld [vmem:[#allocation8 + $0x18] sm:$0xff]
    %v238 = vld [vmem:[#allocation8 + $0x20] sm:$0xff]
    %v239 = vld [vmem:[#allocation8 + $0x28] sm:$0xff]
    %v240 = vld [vmem:[#allocation8 + $0x30] sm:$0xff]
    %v241 = vld [vmem:[#allocation8 + $0x38] sm:$0xff]
    %v242 = vld [vmem:[#allocation8 + $0x40] sm:$0xff]
    %v243 = vld [vmem:[#allocation8 + $0x48] sm:$0xff]
    %v244 = vld [vmem:[#allocation8 + $0x50] sm:$0xff]
    %v245 = vld [vmem:[#allocation8 + $0x58] sm:$0xff]
    %v246 = vld [vmem:[#allocation8 + $0x60] sm:$0xff]
    %v247 = vld [vmem:[#allocation8 + $0x68] sm:$0xff]
    %v248 = vld [vmem:[#allocation8 + $0x70] sm:$0xff]
    %v249 = vld [vmem:[#allocation8 + $0x78] sm:$0xff]
    %v250 = vld [vmem:[#allocation8 + $0x80] sm:$0xff]
    %v251 = vld [vmem:[#allocation8 + $0x88] sm:$0xff]
    %v252 = vld [vmem:[#allocation8 + $0x90] sm:$0xff]
    %v253 = vld [vmem:[#allocation8 + $0x98] sm:$0xff]
    %v254 = vld [vmem:[#allocation8 + $0xa0] sm:$0xff]
    %v255 = vld [vmem:[#allocation8 + $0xa8] sm:$0xff]
    %v256 = vld [vmem:[#allocation8 + $0xb0] sm:$0xff]
    %v257 = vld [vmem:[#allocation8 + $0xb8] sm:$0xff]
    %v258 = vld [vmem:[#allocation8 + $0xc0] sm:$0xff]
    %v259 = vld [vmem:[#allocation8 + $0xc8] sm:$0xff]
    %v260 = vld [vmem:[#allocation8 + $0xd0] sm:$0xff]
    %v261 = vld [vmem:[#allocation8 + $0xd8] sm:$0xff]
    %v262 = vld [vmem:[#allocation8 + $0xe0] sm:$0xff]
    %v263 = vld [vmem:[#allocation8 + $0xe8] sm:$0xff]
    %v264 = vld [vmem:[#allocation8 + $0xf0] sm:$0xff]
    %v265 = vld [vmem:[#allocation8 + $0xf8] sm:$0xff]
    %v266 = vld [vmem:[%s6] sm:$0x1]
    %v268 = vperm.slane %v266, 0
    %270 = vmatpush.msra.mxu0 %v249
    %271 = vmatpush.msra.mxu0 %v248
    %272 = vmatpush.msra.mxu0 %v247
    %273 = vmatpush.msra.mxu0 %v246
    %274 = vmatpush.msra.mxu0 %v245
    %275 = vmatpush.msra.mxu0 %v244
    %276 = vmatpush.msra.mxu0 %v243
    %277 = vmatpush.msra.mxu0 %v242
    %278 = vmatpush.msra.mxu0 %v241
    %279 = vmatpush.msra.mxu0 %v240
    %280 = vmatpush.msra.mxu0 %v239
    %281 = vmatpush.msra.mxu0 %v238
    %282 = vmatpush.msra.mxu0 %v237
    %283 = vmatpush.msra.mxu0 %v236
    %284 = vmatpush.msra.mxu0 %v235
    %285 = vmatpush.msra.mxu0 %v234
    %286 = vmatmul.f32.gmra.mxu0 %v232
    %v287 = vpop.f32.mrf.mxu0
    %v288 = vadd.f32 %v268, %v287
    %289 = vdwg.mxu0
    %290 = vmatpush.msra.mxu0 %v265
    %291 = vmatpush.msra.mxu0 %v264
    %292 = vmatpush.msra.mxu0 %v263
    %293 = vmatpush.msra.mxu0 %v262
    %294 = vmatpush.msra.mxu0 %v261
    %295 = vmatpush.msra.mxu0 %v260
    %296 = vmatpush.msra.mxu0 %v259
    %297 = vmatpush.msra.mxu0 %v258
    %298 = vmatpush.msra.mxu0 %v257
    %299 = vmatpush.msra.mxu0 %v256
    %300 = vmatpush.msra.mxu0 %v255
    %301 = vmatpush.msra.mxu0 %v254
    %302 = vmatpush.msra.mxu0 %v253
    %303 = vmatpush.msra.mxu0 %v252
    %304 = vmatpush.msra.mxu0 %v251
    %305 = vmatpush.msra.mxu0 %v250
    %306 = vmatmul.f32.gmra.mxu0 %v233
    %v307 = vpop.f32.mrf.mxu0
    %v308 = vadd.f32 %v288, %v307
    %309 = vdwg.mxu0
    %v310 = vmul.f32 %v308, 0.01
    %v311 = vmax.f32 %v308, %v310
    %v312 = vld [vmem:[#allocation10] sm:$0xff]
    %v313 = vld [vmem:[#allocation10 + $0x8] sm:$0xff]
    %v314 = vld [vmem:[#allocation10 + $0x10] sm:$0xff]
    %v315 = vld [vmem:[#allocation10 + $0x18] sm:$0xff]
    %v316 = vld [vmem:[#allocation10 + $0x20] sm:$0xff]
    %v317 = vld [vmem:[#allocation10 + $0x28] sm:$0xff]
    %v318 = vld [vmem:[#allocation10 + $0x30] sm:$0xff]
    %v319 = vld [vmem:[#allocation10 + $0x38] sm:$0xff]
    %v320 = vld [vmem:[#allocation10 + $0x40] sm:$0xff]
    %v321 = vld [vmem:[#allocation10 + $0x48] sm:$0xff]
    %v322 = vld [vmem:[#allocation10 + $0x50] sm:$0xff]
    %v323 = vld [vmem:[#allocation10 + $0x58] sm:$0xff]
    %v324 = vld [vmem:[#allocation10 + $0x60] sm:$0xff]
    %v325 = vld [vmem:[#allocation10 + $0x68] sm:$0xff]
    %v326 = vld [vmem:[#allocation10 + $0x70] sm:$0xff]
    %v327 = vld [vmem:[#allocation10 + $0x78] sm:$0xff]
    %v328 = vld [vmem:[%s8] sm:$0x1]
    %v330 = vperm.slane %v328, 0
    %332 = vmatpush.msra.mxu0 %v327
    %333 = vmatpush.msra.mxu0 %v326
    %334 = vmatpush.msra.mxu0 %v325
    %335 = vmatpush.msra.mxu0 %v324
    %336 = vmatpush.msra.mxu0 %v323
    %337 = vmatpush.msra.mxu0 %v322
    %338 = vmatpush.msra.mxu0 %v321
    %339 = vmatpush.msra.mxu0 %v320
    %340 = vmatpush.msra.mxu0 %v319
    %341 = vmatpush.msra.mxu0 %v318
    %342 = vmatpush.msra.mxu0 %v317
    %343 = vmatpush.msra.mxu0 %v316
    %344 = vmatpush.msra.mxu0 %v315
    %345 = vmatpush.msra.mxu0 %v314
    %346 = vmatpush.msra.mxu0 %v313
    %347 = vmatpush.msra.mxu0 %v312
    %348 = vmatmul.f32.gmra.mxu0 %v311
    %v349 = vpop.f32.mrf.mxu0
    %v350 = vadd.f32 %v330, %v349
    %351 = vdwg.mxu0
    %352 = vst [vmem:[#allocation11] sm:$0xff] %v350
    // Predicated region
    $region58: #{tpu_custom_call.1} parent=1 // pred_check
      _
    $region59: #{tpu_custom_call.1} parent=1 // pred_check_branch
      %354 = sbr.rel (0) target = $region61
    $region60: #{tpu_custom_call.1} parent=1 // pred_region
      %356 = vsyncadd [#allocation4], 0
      %s358 = sshll.u32 [#allocation11], 4
      %s359 = int_to_ptr.vmem [resolvable:$true] %s358
      %s360 = sshll.u32 %s9, 4
      %s361 = int_to_ptr.hbm [resolvable:$true] %s360
      %363 = dma.vmem_to_hbm [thread:$0]  %s359, 128, %s361, [#allocation4]
    $region61: #{tpu_custom_call.1} parent=1 // pred_fallthru
      _
    // Predicated region
    $region62: #{tpu_custom_call.1} parent=1 // pred_check
      _
    $region63: #{tpu_custom_call.1} parent=1 // pred_check_branch
      %365 = sbr.rel (0) target = $region65
    $region64: #{tpu_custom_call.1} parent=1 // pred_region
      %367 = dma.done [#allocation4], 128
    $region65: #{tpu_custom_call.1} parent=1 // pred_fallthru
      _
    %368 = vsyncpa [#allocation3], 1
    %369 = vsyncpa [#allocation6], 1
    %370 = vsyncpa [#allocation9], 1
    %371 = vsyncpa [#allocation4], 1

</llo_original>
